<compile_context>
chip_gen: v5e
topology: v5e:2x2
jax: 0.10.0
libtpu: 0.0.40
codegen_flags: <defaults>
</compile_context>

<pallas_src>
import functools

import jax
import jax.numpy as jnp
from jax import lax
from jax.experimental import pallas as pl
from jax.experimental.pallas import tpu as pltpu


def _paired_loss_kernel(inputs_ref, adds_ref, targets_ref, cnt_ref,
                        denom_ref, gsum_ref, *, n_rows, n_inner):
    o = pl.program_id(0)          # parallel chunk (TensorCore split on multi-TC chips)
    i = pl.program_id(1)          # sequential batch tile within the chunk

    @pl.when(i == 0)
    def _init():
        denom_ref[...] = jnp.zeros_like(denom_ref)
        gsum_ref[...] = jnp.zeros_like(gsum_ref)

    tile_n, c = inputs_ref.shape
    groups = tile_n // 8

    # Logical (un-clamped) tile index -> global row ids for ragged-edge / overflow masking.
    tile_idx = o * n_inner + i
    row_ids = tile_idx * tile_n + lax.broadcasted_iota(jnp.int32, (tile_n, 1), 0)
    valid = row_ids < n_rows                                              # [tile_n, 1]

    # Zero out padded rows *before* exp so boundary-pad garbage can never produce inf/nan.
    shifted = jnp.where(valid,
                        inputs_ref[...].astype(jnp.float32) - adds_ref[...],
                        jnp.float32(0.0))                                 # [tile_n, C]
    tgt = targets_ref[...]                                                # [tile_n, 1]
    class_idx = lax.broadcasted_iota(jnp.int32, (tile_n, c), 1)

    # denom term: exp(shifted) where class != target, exp(0)=1 where class == target,
    # 0 for rows beyond the real batch.
    term = jnp.where(class_idx == tgt, jnp.float32(1.0), jnp.exp(shifted))
    term = jnp.where(valid, term, jnp.float32(0.0))

    # Count-weighted rows for sum(gathered); padded rows carry weight 0.
    w = jnp.where(valid, cnt_ref[...], jnp.float32(0.0))                  # [tile_n, 1]
    gterm = shifted * w                                                   # [tile_n, C]

    # Fold rows in vreg-aligned groups of 8 only (pure VALU adds); the [8, C] sublane
    # shape keeps all XLU cross-sublane/lane reductions out of the hot loop.
    denom_ref[...] += jnp.sum(term.reshape(groups, 8, c), axis=0, keepdims=True)
    gsum_ref[...] += jnp.sum(gterm.reshape(groups, 8, c), axis=0, keepdims=True)


def paired_loss(inputs, targets, adds, *, target_tile_bytes=4 * 1024 * 1024):
    n, c = inputs.shape
    itemsize = jnp.dtype(inputs.dtype).itemsize

    # Byte-budget batch tile (accounts for 128-lane padding of the input tile and of the
    # narrow per-row targets/cnt columns in VMEM), sublane aligned.
    c_pad = pl.cdiv(c, 128) * 128
    bytes_per_row = c_pad * itemsize + 2 * 128 * 4
    tile_n = max(8, (target_tile_bytes // bytes_per_row) // 8 * 8)
    tile_n = min(tile_n, pl.cdiv(n, 8) * 8)
    total_tiles = pl.cdiv(n, tile_n)

    # Two-phase reduction: outer "parallel" axis (up to 2 chunks -> both TCs on v7x),
    # inner "arbitrary" axis streams batch tiles.
    n_outer = 2 if total_tiles >= 2 else 1
    n_inner = pl.cdiv(total_tiles, n_outer)
    last_tile = total_tiles - 1

    adds_2d = adds.astype(jnp.float32).reshape(1, c)
    targets_2d = targets.astype(jnp.int32).reshape(n, 1)
    # Row-gather weight: histogram of targets over row indices [0, n).
    cnt_2d = jnp.bincount(targets.astype(jnp.int32), length=n).astype(jnp.float32).reshape(n, 1)

    def tile_map(o, i):
        # Clamp duplicate tail tiles; the kernel zeroes their contribution via row masking.
        return (jnp.minimum(o * n_inner + i, last_tile), 0)

    kernel = functools.partial(_paired_loss_kernel, n_rows=n, n_inner=n_inner)

    denom_part, gsum_part = pl.pallas_call(
        kernel,
        out_shape=(
            jax.ShapeDtypeStruct((n_outer, 8, c), jnp.float32),   # denom partials
            jax.ShapeDtypeStruct((n_outer, 8, c), jnp.float32),   # gathered-sum partials
        ),
        grid_spec=pltpu.PrefetchScalarGridSpec(
            num_scalar_prefetch=0,
            grid=(n_outer, n_inner),
            in_specs=[
                pl.BlockSpec((tile_n, c), tile_map),              # logits tile (native dtype)
                pl.BlockSpec((1, c), lambda o, i: (0, 0)),        # adds (resident)
                pl.BlockSpec((tile_n, 1), tile_map),              # targets tile
                pl.BlockSpec((tile_n, 1), tile_map),              # target-histogram tile
            ],
            out_specs=(
                pl.BlockSpec((1, 8, c), lambda o, i: (o, 0, 0)),  # resident accumulator
                pl.BlockSpec((1, 8, c), lambda o, i: (o, 0, 0)),  # resident accumulator
            ),
        ),
        compiler_params=pltpu.CompilerParams(
            dimension_semantics=("parallel", "arbitrary"),
            vmem_limit_bytes=32 * 1024 * 1024,   # usage ~2x4 MiB; safe on v5e/v6e/v7x
        ),
    )(inputs, adds_2d, targets_2d, cnt_2d)

    # Tiny final combine (n_outer * 8 * C elements) in plain JAX.
    denom = jnp.sum(denom_part, axis=(0, 1))       # [C]
    gsum = jnp.sum(gsum_part)                      # scalar: sum over gathered rows
    return (n * jnp.sum(jnp.log(denom)) - gsum) / (n * c)


def paired_loss_ref(inputs, targets, adds):
    # Pure-JAX reference mirroring the PyTorch forward exactly (targets must be < N).
    shifted = inputs - adds[None, :]
    onehot = jax.nn.one_hot(targets, inputs.shape[1], dtype=inputs.dtype)
    denom = jnp.sum(jnp.exp(shifted * (onehot == 0)), axis=0)          # [C]
    gathered = shifted[targets]                                        # [N, C] row gather
    loss = -jnp.log(jnp.exp(gathered) / denom[None, :])
    return jnp.mean(loss)


if __name__ == "__main__":
    key = jax.random.PRNGKey(0)
    N, C = 16, 8          # batch, num_classes (C <= N so torch's inputs[targets] is valid)
    T = 0.5
    k1, k2 = jax.random.split(key)
    inputs = jax.random.normal(k1, (N, C), dtype=jnp.float32)
    targets = jax.random.randint(k2, (N,), 0, C, dtype=jnp.int32)

    # Deterministic per-client class distribution (positive counts), as in __init__.
    client_dist = jnp.arange(1, C + 1, dtype=jnp.float32)
    adds = T * jnp.power(client_dist, -0.25)

    out = jax.block_until_ready(paired_loss(inputs, targets, adds))
    ref = paired_loss_ref(inputs, targets, adds)
    assert jnp.allclose(out, ref, rtol=1e-5, atol=1e-4), (out, ref)
    print("KERNEL_OK")
</pallas_src>

<mosaic_0001>
module attributes {stable_mosaic.version = 11 : i64} {
  func.func @_paired_loss_kernel(%arg0: i32, %arg1: i32, %arg2: memref<16x8xf32, #tpu.memory_space<vmem>>, %arg3: memref<1x8xf32, #tpu.memory_space<vmem>>, %arg4: memref<16x1xi32, #tpu.memory_space<vmem>>, %arg5: memref<16x1xf32, #tpu.memory_space<vmem>>, %arg6: memref<1x8x8xf32, #tpu.memory_space<vmem>>, %arg7: memref<1x8x8xf32, #tpu.memory_space<vmem>>) attributes {dimension_semantics = [#tpu.dimension_semantics<parallel>, #tpu.dimension_semantics<arbitrary>], iteration_bounds = array<i64: 1, 1>, scalar_prefetch = 0 : i64, scratch_operands = 0 : i64, tpu.core_type = #tpu.core_type<tc>, window_params = [{transform_indices = @transform_0, window_bounds = array<i64: 16, 8>}, {pipeline_mode = #tpu.pipeline_mode<synchronous>, transform_indices = @transform_1, window_bounds = array<i64: 1, 8>}, {transform_indices = @transform_2, window_bounds = array<i64: 16, 1>}, {transform_indices = @transform_3, window_bounds = array<i64: 16, 1>}, {transform_indices = @transform_4, window_bounds = array<i64: 1, 8, 8>}, {transform_indices = @transform_5, window_bounds = array<i64: 1, 8, 8>}]} {
    %c0_i32 = arith.constant 0 : i32
    %0 = arith.cmpi eq, %arg1, %c0_i32 : i32
    %1 = arith.extui %0 : i1 to i32
    %c0_i32_0 = arith.constant 0 : i32
    %2 = arith.cmpi ne, %1, %c0_i32_0 : i32
    scf.if %2 {
      %cst_26 = arith.constant 0.000000e+00 : f32
      %47 = vector.broadcast %cst_26 : f32 to vector<1x8x8xf32>
      %c0_27 = arith.constant 0 : index
      %c0_28 = arith.constant 0 : index
      %c0_29 = arith.constant 0 : index
      %48 = vector.load %arg6[%c0_27, %c0_28, %c0_29] : memref<1x8x8xf32, #tpu.memory_space<vmem>>, vector<1x8x8xf32>
      tpu.vector_store %arg6[%c0_27, %c0_28, %c0_29], %47 {strides = array<i32>} : memref<1x8x8xf32, #tpu.memory_space<vmem>>, vector<1x8x8xf32>,
      %cst_30 = arith.constant 0.000000e+00 : f32
      %49 = vector.broadcast %cst_30 : f32 to vector<1x8x8xf32>
      %c0_31 = arith.constant 0 : index
      %c0_32 = arith.constant 0 : index
      %c0_33 = arith.constant 0 : index
      %50 = vector.load %arg7[%c0_31, %c0_32, %c0_33] : memref<1x8x8xf32, #tpu.memory_space<vmem>>, vector<1x8x8xf32>
      tpu.vector_store %arg7[%c0_31, %c0_32, %c0_33], %49 {strides = array<i32>} : memref<1x8x8xf32, #tpu.memory_space<vmem>>, vector<1x8x8xf32>,
    } else {
    }
    %c1_i32 = arith.constant 1 : i32
    %3 = arith.muli %arg0, %c1_i32 : i32
    %4 = arith.addi %3, %arg1 : i32
    %c16_i32 = arith.constant 16 : i32
    %5 = arith.muli %4, %c16_i32 : i32
    %6 = tpu.iota {dimensions = array<i32: 0>} : vector<16x1xi32>
    %7 = vector.broadcast %5 : i32 to vector<16x1xi32>
    %8 = arith.addi %7, %6 : vector<16x1xi32>
    %c16_i32_1 = arith.constant 16 : i32
    %9 = vector.broadcast %c16_i32_1 : i32 to vector<16x1xi32>
    %10 = arith.cmpi slt, %8, %9 : vector<16x1xi32>
    %c0 = arith.constant 0 : index
    %c0_2 = arith.constant 0 : index
    %11 = vector.load %arg2[%c0, %c0_2] : memref<16x8xf32, #tpu.memory_space<vmem>>, vector<16x8xf32>
    %c0_3 = arith.constant 0 : index
    %c0_4 = arith.constant 0 : index
    %12 = vector.load %arg3[%c0_3, %c0_4] : memref<1x8xf32, #tpu.memory_space<vmem>>, vector<1x8xf32>
    %13 = vector.broadcast %12 : vector<1x8xf32> to vector<16x8xf32>
    %14 = arith.subf %11, %13 : vector<16x8xf32>
    %cst = arith.constant 0.000000e+00 : f32
    %15 = vector.shape_cast %10 : vector<16x1xi1> to vector<16x1xi1>
    %16 = vector.broadcast %15 : vector<16x1xi1> to vector<16x8xi1>
    %17 = vector.broadcast %cst : f32 to vector<16x8xf32>
    %18 = arith.select %16, %14, %17 : vector<16x8xi1>, vector<16x8xf32>
    %c0_5 = arith.constant 0 : index
    %c0_6 = arith.constant 0 : index
    %19 = vector.load %arg4[%c0_5, %c0_6] : memref<16x1xi32, #tpu.memory_space<vmem>>, vector<16x1xi32>
    %20 = tpu.iota {dimensions = array<i32: 1>} : vector<16x8xi32>
    %21 = vector.broadcast %19 : vector<16x1xi32> to vector<16x8xi32>
    %22 = arith.cmpi eq, %20, %21 : vector<16x8xi32>
    %23 = math.exp %18 : vector<16x8xf32>
    %cst_7 = arith.constant 1.000000e+00 : f32
    %24 = vector.broadcast %cst_7 : f32 to vector<16x8xf32>
    %25 = arith.select %22, %24, %23 : vector<16x8xi1>, vector<16x8xf32>
    %cst_8 = arith.constant 0.000000e+00 : f32
    %26 = vector.shape_cast %10 : vector<16x1xi1> to vector<16x1xi1>
    %27 = vector.broadcast %26 : vector<16x1xi1> to vector<16x8xi1>
    %28 = vector.broadcast %cst_8 : f32 to vector<16x8xf32>
    %29 = arith.select %27, %25, %28 : vector<16x8xi1>, vector<16x8xf32>
    %c0_9 = arith.constant 0 : index
    %c0_10 = arith.constant 0 : index
    %30 = vector.load %arg5[%c0_9, %c0_10] : memref<16x1xf32, #tpu.memory_space<vmem>>, vector<16x1xf32>
    %cst_11 = arith.constant 0.000000e+00 : f32
    %31 = vector.broadcast %cst_11 : f32 to vector<16x1xf32>
    %32 = arith.select %10, %30, %31 : vector<16x1xi1>, vector<16x1xf32>
    %33 = vector.broadcast %32 : vector<16x1xf32> to vector<16x8xf32>
    %34 = arith.mulf %18, %33 : vector<16x8xf32>
    %c0_12 = arith.constant 0 : index
    %c0_13 = arith.constant 0 : index
    %c0_14 = arith.constant 0 : index
    %35 = vector.load %arg6[%c0_12, %c0_13, %c0_14] : memref<1x8x8xf32, #tpu.memory_space<vmem>>, vector<1x8x8xf32>
    %36 = vector.shape_cast %29 : vector<16x8xf32> to vector<2x8x8xf32>
    %cst_15 = arith.constant dense<0.000000e+00> : vector<8x8xf32>
    %37 = vector.multi_reduction <add>, %36, %cst_15 [0] : vector<2x8x8xf32> to vector<8x8xf32>
    %38 = vector.shape_cast %37 : vector<8x8xf32> to vector<1x8x8xf32>
    %39 = arith.addf %35, %38 : vector<1x8x8xf32>
    %c0_16 = arith.constant 0 : index
    %c0_17 = arith.constant 0 : index
    %c0_18 = arith.constant 0 : index
    %40 = vector.load %arg6[%c0_16, %c0_17, %c0_18] : memref<1x8x8xf32, #tpu.memory_space<vmem>>, vector<1x8x8xf32>
    tpu.vector_store %arg6[%c0_16, %c0_17, %c0_18], %39 {strides = array<i32>} : memref<1x8x8xf32, #tpu.memory_space<vmem>>, vector<1x8x8xf32>,
    %c0_19 = arith.constant 0 : index
    %c0_20 = arith.constant 0 : index
    %c0_21 = arith.constant 0 : index
    %41 = vector.load %arg7[%c0_19, %c0_20, %c0_21] : memref<1x8x8xf32, #tpu.memory_space<vmem>>, vector<1x8x8xf32>
    %42 = vector.shape_cast %34 : vector<16x8xf32> to vector<2x8x8xf32>
    %cst_22 = arith.constant dense<0.000000e+00> : vector<8x8xf32>
    %43 = vector.multi_reduction <add>, %42, %cst_22 [0] : vector<2x8x8xf32> to vector<8x8xf32>
    %44 = vector.shape_cast %43 : vector<8x8xf32> to vector<1x8x8xf32>
    %45 = arith.addf %41, %44 : vector<1x8x8xf32>
    %c0_23 = arith.constant 0 : index
    %c0_24 = arith.constant 0 : index
    %c0_25 = arith.constant 0 : index
    %46 = vector.load %arg7[%c0_23, %c0_24, %c0_25] : memref<1x8x8xf32, #tpu.memory_space<vmem>>, vector<1x8x8xf32>
    tpu.vector_store %arg7[%c0_23, %c0_24, %c0_25], %45 {strides = array<i32>} : memref<1x8x8xf32, #tpu.memory_space<vmem>>, vector<1x8x8xf32>,
    return
  }
  func.func @transform_0(%arg0: i32, %arg1: i32) -> (i32, i32) {
    %c1_i32 = arith.constant 1 : i32
    %0 = arith.muli %arg0, %c1_i32 : i32
    %1 = arith.addi %0, %arg1 : i32
    %c0_i32 = arith.constant 0 : i32
    %2 = arith.minsi %1, %c0_i32 : i32
    %c0_i32_0 = arith.constant 0 : i32
    %c0_i32_1 = arith.constant 0 : i32
    return %2, %c0_i32_0 : i32, i32
  }
  func.func @transform_1(%arg0: i32, %arg1: i32) -> (i32, i32) {
    %c0_i32 = arith.constant 0 : i32
    %c0_i32_0 = arith.constant 0 : i32
    %c0_i32_1 = arith.constant 0 : i32
    return %c0_i32, %c0_i32_0 : i32, i32
  }
  func.func @transform_2(%arg0: i32, %arg1: i32) -> (i32, i32) {
    %c1_i32 = arith.constant 1 : i32
    %0 = arith.muli %arg0, %c1_i32 : i32
    %1 = arith.addi %0, %arg1 : i32
    %c0_i32 = arith.constant 0 : i32
    %2 = arith.minsi %1, %c0_i32 : i32
    %c0_i32_0 = arith.constant 0 : i32
    %c0_i32_1 = arith.constant 0 : i32
    return %2, %c0_i32_0 : i32, i32
  }
  func.func @transform_3(%arg0: i32, %arg1: i32) -> (i32, i32) {
    %c1_i32 = arith.constant 1 : i32
    %0 = arith.muli %arg0, %c1_i32 : i32
    %1 = arith.addi %0, %arg1 : i32
    %c0_i32 = arith.constant 0 : i32
    %2 = arith.minsi %1, %c0_i32 : i32
    %c0_i32_0 = arith.constant 0 : i32
    %c0_i32_1 = arith.constant 0 : i32
    return %2, %c0_i32_0 : i32, i32
  }
  func.func @transform_4(%arg0: i32, %arg1: i32) -> (i32, i32, i32) {
    %c0_i32 = arith.constant 0 : i32
    %c0_i32_0 = arith.constant 0 : i32
    %c0_i32_1 = arith.constant 0 : i32
    return %arg0, %c0_i32, %c0_i32_0 : i32, i32, i32
  }
  func.func @transform_5(%arg0: i32, %arg1: i32) -> (i32, i32, i32) {
    %c0_i32 = arith.constant 0 : i32
    %c0_i32_0 = arith.constant 0 : i32
    %c0_i32_1 = arith.constant 0 : i32
    return %arg0, %c0_i32, %c0_i32_0 : i32, i32, i32
  }
}

</mosaic_0001>

<llo_original>
// kernel: tpu_custom_call.1
$region0: #{tpu_custom_call.1}
  #allocation0 [shape = 'u32[]', space=smem, size = 0x4, offset = 0x4, fixed_abs, tag = 'smem constant byte address 0x4 - core index']
  #allocation1 [shape = 'u32[72,128]{1,0:T(1,128)}', space=vmem, size = 0x9000, scoped, tag = 'internal scratch']
  %s0 = inlined_call_operand.vmem [shape: f32[16,8], index: 0, kind: input, shape index: {}]
  %s1 = inlined_call_operand.vmem [shape: f32[1,8], index: 1, kind: input, shape index: {}]
  %s2 = inlined_call_operand.vmem [shape: s32[16,1], index: 2, kind: input, shape index: {}]
  %s3 = inlined_call_operand.vmem [shape: f32[16,1], index: 3, kind: input, shape index: {}]
  %s4 = inlined_call_operand.hbm [shape: f32[1,8,8], index: 4, kind: output, shape index: {0}]
  %s5 = inlined_call_operand.hbm [shape: f32[1,8,8], index: 5, kind: output, shape index: {1}]
  %6 = xla_tuple %s4, %s5
  %s7 = sld [smem:[#allocation0]]
  $region38: #{tpu_custom_call.1} parent=0
    _
  %s9 = ssub.s32 1, %s7
  %s10 = scalar_select 0, %s9, %s7
  $region1: #{tpu_custom_call.1} parent=0
    #allocation2 [shape = 'u8[4096]{0}', space=vmem, size = 0x1000, scoped, tag = 'output window, operand 0, single buffered']
    #allocation3 [shape = 's32[1]{0}', space=sflag, size = 0x4, scoped, tag = 'scoped memory for tpu_custom_call.1']
    #allocation4 [shape = 'u8[4096]{0}', space=vmem, size = 0x1000, scoped, tag = 'output window, operand 1, single buffered']
    #allocation5 [shape = 's32[1]{0}', space=sflag, size = 0x4, scoped, tag = 'scoped memory for tpu_custom_call.1']
    %11 = vsyncpa [#allocation3], 0
    %12 = vsyncpa [#allocation5], 0
    // Predicated region
    $region2: #{tpu_custom_call.1} parent=1 // pred_check
      _
    $region3: #{tpu_custom_call.1} parent=1 // pred_check_branch
      %14 = sbr.rel (0) target = $region5
    $region4: #{tpu_custom_call.1} parent=1 // pred_region
      %s15 = sadd.s32 0, 0
      %p16 = scmp.lt.s32.totalorder %s15, 0
      %s17 = scalar_select %p16, %s15, 0
      %s18 = smul.u32 2, %s17
      %p19 = scmp.lt.s32.totalorder %s18, 1
      %s20 = scalar_select %p19, %s18, 1
      %s21 = smul.addr %s20, 8
      %s22 = scalar_lea.vmem %s0, %s21
      %s23 = sadd.s32 0, 0
      %p24 = scmp.lt.s32.totalorder %s23, 0
      %s25 = scalar_select %p24, %s23, 0
      %s26 = smul.u32 2, %s25
    $region5: #{tpu_custom_call.1} parent=1 // pred_fallthru
      _
    // Predicated region
    $region6: #{tpu_custom_call.1} parent=1 // pred_check
      _
    $region7: #{tpu_custom_call.1} parent=1 // pred_check_branch
      %28 = sbr.rel (0) target = $region9
    $region8: #{tpu_custom_call.1} parent=1 // pred_region
      _
    $region9: #{tpu_custom_call.1} parent=1 // pred_fallthru
      _
    // Predicated region
    $region10: #{tpu_custom_call.1} parent=1 // pred_check
      _
    $region11: #{tpu_custom_call.1} parent=1 // pred_check_branch
      %30 = sbr.rel (0) target = $region13
    $region12: #{tpu_custom_call.1} parent=1 // pred_region
      %s31 = sadd.s32 0, 0
      %p32 = scmp.lt.s32.totalorder %s31, 0
      %s33 = scalar_select %p32, %s31, 0
      %s34 = smul.u32 2, %s33
      %p35 = scmp.lt.s32.totalorder %s34, 1
      %s36 = scalar_select %p35, %s34, 1
      %s37 = smul.addr %s36, 8
      %s38 = scalar_lea.vmem %s2, %s37
      %s39 = sadd.s32 0, 0
      %p40 = scmp.lt.s32.totalorder %s39, 0
      %s41 = scalar_select %p40, %s39, 0
      %s42 = smul.u32 2, %s41
    $region13: #{tpu_custom_call.1} parent=1 // pred_fallthru
      _
    // Predicated region
    $region14: #{tpu_custom_call.1} parent=1 // pred_check
      _
    $region15: #{tpu_custom_call.1} parent=1 // pred_check_branch
      %44 = sbr.rel (0) target = $region17
    $region16: #{tpu_custom_call.1} parent=1 // pred_region
      %s45 = sadd.s32 0, 0
      %p46 = scmp.lt.s32.totalorder %s45, 0
      %s47 = scalar_select %p46, %s45, 0
      %s48 = smul.u32 2, %s47
      %p49 = scmp.lt.s32.totalorder %s48, 1
      %s50 = scalar_select %p49, %s48, 1
      %s51 = smul.addr %s50, 8
      %s52 = scalar_lea.vmem %s3, %s51
      %s53 = sadd.s32 0, 0
      %p54 = scmp.lt.s32.totalorder %s53, 0
      %s55 = scalar_select %p54, %s53, 0
      %s56 = smul.u32 2, %s55
    $region17: #{tpu_custom_call.1} parent=1 // pred_fallthru
      _
    %s57 = sadd.s32 0, 0
    %p58 = scmp.lt.s32.totalorder %s57, 0
    %s59 = scalar_select %p58, %s57, 0
    %s60 = smul.u32 2, %s59
    %p61 = scmp.lt.s32.totalorder %s60, 1
    %s62 = scalar_select %p61, %s60, 1
    %s63 = smul.addr %s62, 8
    %s64 = scalar_lea.vmem %s0, %s63
    %s65 = sadd.s32 0, 0
    %p66 = scmp.lt.s32.totalorder %s65, 0
    %s67 = scalar_select %p66, %s65, 0
    %s68 = smul.u32 2, %s67
    %p69 = scmp.lt.s32.totalorder %s68, 1
    %s70 = scalar_select %p69, %s68, 1
    %s71 = smul.addr %s70, 8
    %s72 = scalar_lea.vmem %s2, %s71
    %s73 = sadd.s32 0, 0
    %p74 = scmp.lt.s32.totalorder %s73, 0
    %s75 = scalar_select %p74, %s73, 0
    %s76 = smul.u32 2, %s75
    %p77 = scmp.lt.s32.totalorder %s76, 1
    %s78 = scalar_select %p77, %s76, 1
    %s79 = smul.addr %s78, 8
    %s80 = scalar_lea.vmem %s3, %s79
    %s81 = sadd.s32 0, 0
    %p82 = scmp.lt.s32.totalorder %s81, 0
    %s83 = scalar_select %p82, %s81, 0
    %s84 = smul.u32 2, %s83
    %p85 = scmp.lt.s32.totalorder %s84, 1
    %s86 = scalar_select %p85, %s84, 1
    %s87 = smul.addr %s86, 8
    %s88 = scalar_lea.vmem %s0, %s87
    %s89 = sadd.s32 0, 0
    %p90 = scmp.lt.s32.totalorder %s89, 0
    %s91 = scalar_select %p90, %s89, 0
    %s92 = smul.u32 2, %s91
    %s93 = sadd.s32 0, 0
    %p94 = scmp.lt.s32.totalorder %s93, 0
    %s95 = scalar_select %p94, %s93, 0
    %s96 = smul.u32 2, %s95
    %p97 = scmp.lt.s32.totalorder %s96, 1
    %s98 = scalar_select %p97, %s96, 1
    %s99 = smul.addr %s98, 8
    %s100 = scalar_lea.vmem %s2, %s99
    %s101 = sadd.s32 0, 0
    %p102 = scmp.lt.s32.totalorder %s101, 0
    %s103 = scalar_select %p102, %s101, 0
    %s104 = smul.u32 2, %s103
    %s105 = sadd.s32 0, 0
    %p106 = scmp.lt.s32.totalorder %s105, 0
    %s107 = scalar_select %p106, %s105, 0
    %s108 = smul.u32 2, %s107
    %p109 = scmp.lt.s32.totalorder %s108, 1
    %s110 = scalar_select %p109, %s108, 1
    %s111 = smul.addr %s110, 8
    %s112 = scalar_lea.vmem %s3, %s111
    %s113 = sadd.s32 0, 0
    %p114 = scmp.lt.s32.totalorder %s113, 0
    %s115 = scalar_select %p114, %s113, 0
    %s116 = smul.u32 2, %s115
    %p117 = scmp.eq.s32.totalorder 0, 0
    // Predicated region
    $region18: #{tpu_custom_call.1} parent=1 // pred_check
      %p118 = pneg %p117
    $region19: #{tpu_custom_call.1} parent=1 // pred_check_branch
      %120 = sbr.rel (%p118) target = $region21
    $region20: #{tpu_custom_call.1} parent=1 // pred_region
      %vm121 = vcmask 64512
      %122 = vst.msk [vmem:[#allocation2] sm:$0xff] %vm121, 0.0
      %123 = vst.msk [vmem:[#allocation4] sm:$0xff] %vm121, 0.0
    $region21: #{tpu_custom_call.1} parent=1 // pred_fallthru
      _
    %s124 = sadd.s32 0, 0
    %s125 = smul.u32 %s124, 16
    %v126 = vlaneseq
    %v127 = vshrl.u32 %v126, 7
    %v128 = vadd.s32 %v127, 8
    %v129 = vstv %s125
    %v130 = vadd.s32 %v129, %v127
    %v131 = vadd.s32 %v129, %v128
    %vm132 = vcmp.lt.s32.totalorder %v130, 16
    %vm133 = vcmp.lt.s32.totalorder %v131, 16
    %v134 = vld [vmem:[%s88] sm:$0xff]
    %v135 = vld [vmem:[%s88 + $0x8] sm:$0xff]
    %v136 = vld [vmem:[%s1] sm:$0x1]
    %v138 = vperm.slane %v136, 0
    %v140 = vsub.f32 %v134, %v138
    %v141 = vsub.f32 %v135, %v138
    %v142 = vsel %vm132, 1, 0
    %v143 = vsel %vm133, 1, 0
    %vm144 = vcmp.eq.s32.totalorder %v142, 1
    %vm145 = vcmp.eq.s32.totalorder %v143, 1
    %v146 = vsel %vm144, %v140, 0.0
    %v147 = vsel %vm145, %v141, 0.0
    %v148 = vld [vmem:[%s100] sm:$0xff]
    %v149 = vld [vmem:[%s100 + $0x8] sm:$0xff]
    %v150 = vlaneseq
    %v151 = vand.u32 %v150, 127
    %152 = vset.pattern.permute.xlu0 0
    %153 = vperm.xlu0 %152, %v148
    %v154 = vpop.permute.xlu0 %153
    %155 = vset.pattern.permute.xlu0 0
    %156 = vperm.xlu0 %155, %v149
    %v157 = vpop.permute.xlu0 %156
    %vm158 = vcmp.eq.s32.totalorder %v151, %v154
    %vm159 = vcmp.eq.s32.totalorder %v151, %v157
    %v160 = vmul.f32 %v146, 1.442695
    %v161 = vpow.pop %v160
    %v162 = vmul.f32 %v147, 1.442695
    %v163 = vpow.pop %v162
    %v164 = vsel %vm158, 1.0, %v161
    %v165 = vsel %vm159, 1.0, %v163
    %v166 = vsel %vm144, %v164, 0.0
    %v167 = vsel %vm145, %v165, 0.0
    %v168 = vld [vmem:[%s112] sm:$0xff]
    %v169 = vld [vmem:[%s112 + $0x8] sm:$0xff]
    %v170 = vsel %vm132, %v168, 0.0
    %v171 = vsel %vm133, %v169, 0.0
    %173 = vset.pattern.permute.xlu0 0
    %174 = vperm.xlu0 %173, %v170
    %v175 = vpop.permute.xlu0 %174
    %178 = vset.pattern.permute.xlu0 0
    %179 = vperm.xlu0 %178, %v171
    %v180 = vpop.permute.xlu0 %179
    %v182 = vmul.f32 %v146, %v175
    %v183 = vmul.f32 %v147, %v180
    %v184 = vld [vmem:[#allocation2] sm:$0xff]
    %vm185 = vcmask 64512
    %v186 = vsel %vm185, %v166, 0.0
    %v187 = vsel %vm185, %v167, 0.0
    %v188 = vadd.f32 %v186, %v187
    %v189 = vadd.f32 %v184, %v188
    %190 = vst.msk [vmem:[#allocation2] sm:$0xff] %vm185, %v189
    %v191 = vld [vmem:[#allocation4] sm:$0xff]
    %v192 = vsel %vm185, %v182, 0.0
    %v193 = vsel %vm185, %v183, 0.0
    %v194 = vadd.f32 %v192, %v193
    %v195 = vadd.f32 %v191, %v194
    %196 = vst.msk [vmem:[#allocation4] sm:$0xff] %vm185, %v195
    // Predicated region
    $region22: #{tpu_custom_call.1} parent=1 // pred_check
      _
    $region23: #{tpu_custom_call.1} parent=1 // pred_check_branch
      %198 = sbr.rel (0) target = $region25
    $region24: #{tpu_custom_call.1} parent=1 // pred_region
      %200 = vsyncadd [#allocation3], 0
      %s202 = sshll.u32 [#allocation2], 4
      %s203 = int_to_ptr.vmem [resolvable:$true] %s202
      %s204 = sshll.u32 %s4, 4
      %s205 = int_to_ptr.hbm [resolvable:$true] %s204
      %207 = dma.vmem_to_hbm [thread:$0]  %s203, 128, %s205, [#allocation3]
    $region25: #{tpu_custom_call.1} parent=1 // pred_fallthru
      _
    // Predicated region
    $region26: #{tpu_custom_call.1} parent=1 // pred_check
      _
    $region27: #{tpu_custom_call.1} parent=1 // pred_check_branch
      %209 = sbr.rel (0) target = $region29
    $region28: #{tpu_custom_call.1} parent=1 // pred_region
      %211 = vsyncadd [#allocation5], 0
      %s213 = sshll.u32 [#allocation4], 4
      %s214 = int_to_ptr.vmem [resolvable:$true] %s213
      %s215 = sshll.u32 %s5, 4
      %s216 = int_to_ptr.hbm [resolvable:$true] %s215
      %218 = dma.vmem_to_hbm [thread:$0]  %s214, 128, %s216, [#allocation5]
    $region29: #{tpu_custom_call.1} parent=1 // pred_fallthru
      _
    // Predicated region
    $region30: #{tpu_custom_call.1} parent=1 // pred_check
      _
    $region31: #{tpu_custom_call.1} parent=1 // pred_check_branch
      %220 = sbr.rel (0) target = $region33
    $region32: #{tpu_custom_call.1} parent=1 // pred_region
      %222 = dma.done [#allocation3], 128
    $region33: #{tpu_custom_call.1} parent=1 // pred_fallthru
      _
    // Predicated region
    $region34: #{tpu_custom_call.1} parent=1 // pred_check
      _
    $region35: #{tpu_custom_call.1} parent=1 // pred_check_branch
      %224 = sbr.rel (0) target = $region37
    $region36: #{tpu_custom_call.1} parent=1 // pred_region
      %226 = dma.done [#allocation5], 128
    $region37: #{tpu_custom_call.1} parent=1 // pred_fallthru
      _
    %227 = vsyncpa [#allocation3], 1
    %228 = vsyncpa [#allocation5], 1

</llo_original>
